<compile_context>
chip_gen: v7x
topology: tpu7x:2x2x1
jax: 0.10.0
libtpu: 0.0.40
codegen_flags: <defaults>
</compile_context>

<pallas_src>
import functools

import jax
import jax.numpy as jnp
from jax.experimental import pallas as pl
from jax.experimental.pallas import tpu as pltpu


def mlp_kernel(x_ref, wgu_ref, wd_ref, out_ref, acc_ref, *, ti):
    # grid = (row tiles m, intermediate tiles k); k is the reduction axis for down_proj.
    k = pl.program_id(1)

    @pl.when(k == 0)
    def _():
        acc_ref[...] = jnp.zeros_like(acc_ref)

    # One fused (tm,H)x(H,2*ti) MXU call for gate and up; f32 accumulation on the MXU.
    gu = jnp.dot(x_ref[...], wgu_ref[...], preferred_element_type=jnp.float32)
    g = gu[:, :ti]
    u = gu[:, ti:]
    h = (jax.nn.silu(g) * u).astype(wd_ref.dtype)          # silu/mul in f32, cast for MXU
    acc_ref[...] += jnp.dot(h, wd_ref[...], preferred_element_type=jnp.float32)

    @pl.when(k == pl.num_programs(1) - 1)
    def _():
        out_ref[...] = acc_ref[...].astype(out_ref.dtype)


def _round_up(x, m):
    return (x + m - 1) // m * m


def _round_down(x, m):
    return (x // m) * m


def _tile_defaults():
    """(tm_target, vmem_limit_bytes, two_tensorcores) per TPU generation."""
    kind = ""
    try:
        kind = jax.devices()[0].device_kind.lower()
    except Exception:
        pass
    if "v7" in kind:
        return 512, 48 * 1024 * 1024, True      # 64 MiB VMEM/TC, 2 TCs/chip
    if "v6" in kind:
        return 1024, 100 * 1024 * 1024, False   # 128 MiB VMEM, ~650 FLOP/B crossover
    if "v5p" in kind or "v4" in kind:
        return 512, 96 * 1024 * 1024, True      # megacore parts
    if "v5" in kind:
        return 512, 96 * 1024 * 1024, False     # v5e: ~240 FLOP/B crossover
    return 512, 48 * 1024 * 1024, False         # conservative fallback


def prepare_mlp_weights(w_gate, w_up, w_down, *, ti=256, dtype=None):
    """One-time (init) weight prep: transpose, pad I to a multiple of ti, and fuse gate|up.

    w_gate, w_up: [I, H] (nn.Linear (out, in) layout); w_down: [H, I].
    Returns:
      wgu_t: [H, 2*I_pad]  tile-interleaved so k-block = [gate_tile_k | up_tile_k]
      wd_t:  [I_pad, H]
    """
    I, H = w_gate.shape
    if dtype is not None:
        w_gate, w_up, w_down = (w.astype(dtype) for w in (w_gate, w_up, w_down))
    I_pad = _round_up(I, ti)
    pad = I_pad - I
    wg_t = jnp.pad(w_gate.T, ((0, 0), (0, pad)))    # (H, I_pad)
    wu_t = jnp.pad(w_up.T, ((0, 0), (0, pad)))      # (H, I_pad)
    wd_t = jnp.pad(w_down.T, ((0, pad), (0, 0)))    # (I_pad, H)  (zero rows -> zero contrib)
    nk = I_pad // ti
    wgu_t = jnp.concatenate(
        [wg_t.reshape(H, nk, ti), wu_t.reshape(H, nk, ti)], axis=-1
    ).reshape(H, 2 * I_pad)
    return wgu_t, wd_t


def mlp_pallas(x, wgu_t, wd_t, *, ti=256, tm=None, out_dtype=None):
    """Fused gated-MLP forward: down(silu(gate(x)) * up(x)).

    x:     [B, S, H]
    wgu_t: [H, 2*I_pad] from prepare_mlp_weights (tile-interleaved gate|up)
    wd_t:  [I_pad, H]
    Returns [B, S, H].
    """
    B, S, H = x.shape
    I_pad, H2 = wd_t.shape
    assert H2 == H and wgu_t.shape == (H, 2 * I_pad) and I_pad % ti == 0
    M = B * S

    tm_target, vmem_limit, two_tc = _tile_defaults()
    if tm is None:
        tm = tm_target
    tm = min(tm, M)
    if two_tc and M >= 512:
        # Keep >= 2 row tiles so megacore shards the "parallel" axis across both TCs.
        tm = min(tm, max(256, _round_down(M // 2, 256)))
    tm = _round_up(max(tm, 1), 8)                 # sublane alignment for (tm, H) blocks
    M_pad = _round_up(M, tm)

    x2 = x.reshape(M, H)
    if M_pad != M:
        x2 = jnp.pad(x2, ((0, M_pad - M), (0, 0)))  # zero rows -> zero output, sliced off

    grid_m = M_pad // tm
    grid_k = I_pad // ti
    grid = (grid_m, grid_k)

    def weight_spec(shape, index_map):
        # Decode regime (single row tile) is irreducibly weight-BW-bound: deepen buffering
        # to keep the DMA queue full across per-step boundaries.  Fall back cleanly if the
        # pipeline_mode kwarg is unavailable in this JAX version.
        if grid_m == 1:
            try:
                return pl.BlockSpec(shape, index_map,
                                    pipeline_mode=pl.Buffered(min(3, grid_k)))
            except (TypeError, AttributeError):
                pass
        return pl.BlockSpec(shape, index_map)

    out = pl.pallas_call(
        functools.partial(mlp_kernel, ti=ti),
        out_shape=jax.ShapeDtypeStruct((M_pad, H), out_dtype or x.dtype),
        grid_spec=pltpu.PrefetchScalarGridSpec(
            num_scalar_prefetch=0,
            grid=grid,
            in_specs=[
                pl.BlockSpec((tm, H), lambda m, k: (m, 0)),      # x rows (resident over k)
                weight_spec((H, 2 * ti), lambda m, k: (0, k)),   # fused gate|up weight slab
                weight_spec((ti, H), lambda m, k: (k, 0)),       # down weight slab
            ],
            out_specs=pl.BlockSpec((tm, H), lambda m, k: (m, 0)),
            scratch_shapes=[pltpu.VMEM((tm, H), jnp.float32)],   # f32 accumulator
        ),
        compiler_params=pltpu.CompilerParams(
            dimension_semantics=("parallel", "arbitrary"),
            vmem_limit_bytes=vmem_limit,
        ),
    )(x2, wgu_t, wd_t)

    return out[:M].reshape(B, S, H)


def reference(x, w_gate, w_up, w_down):
    g = x @ w_gate.T
    u = x @ w_up.T
    return (jax.nn.silu(g) * u) @ w_down.T


if __name__ == "__main__":
    # --- f32 correctness check (small shapes) ---
    B, S, H, I = 2, 8, 256, 512
    kx, kg, ku, kd = jax.random.split(jax.random.PRNGKey(0), 4)
    x = jax.random.normal(kx, (B, S, H), dtype=jnp.float32)
    w_gate = jax.random.normal(kg, (I, H), dtype=jnp.float32) * 0.02   # nn.Linear (out, in)
    w_up = jax.random.normal(ku, (I, H), dtype=jnp.float32) * 0.02
    w_down = jax.random.normal(kd, (H, I), dtype=jnp.float32) * 0.02

    wgu_t, wd_t = prepare_mlp_weights(w_gate, w_up, w_down, ti=256)
    out = jax.block_until_ready(mlp_pallas(x, wgu_t, wd_t, ti=256))
    ref = reference(x, w_gate, w_up, w_down)
    assert out.shape == (B, S, H)
    assert jnp.allclose(out, ref, atol=1e-4, rtol=1e-4), "f32 mismatch vs reference"

    # --- shapes that exercise M and I padding (I=384 is not a multiple of ti=256) ---
    B2, S2, H2, I2 = 1, 12, 128, 384
    kx2, kg2, ku2, kd2 = jax.random.split(jax.random.PRNGKey(1), 4)
    x_p = jax.random.normal(kx2, (B2, S2, H2), dtype=jnp.float32)
    wg_p = jax.random.normal(kg2, (I2, H2), dtype=jnp.float32) * 0.02
    wu_p = jax.random.normal(ku2, (I2, H2), dtype=jnp.float32) * 0.02
    wd_p = jax.random.normal(kd2, (H2, I2), dtype=jnp.float32) * 0.02
    wgu_p, wdt_p = prepare_mlp_weights(wg_p, wu_p, wd_p, ti=256)
    out_p = jax.block_until_ready(mlp_pallas(x_p, wgu_p, wdt_p, ti=256))
    ref_p = reference(x_p, wg_p, wu_p, wd_p)
    assert jnp.allclose(out_p, ref_p, atol=1e-4, rtol=1e-4), "padded-shape mismatch"

    # --- bf16 hot path (production dtype); f32 accumulation inside the kernel ---
    xb = x.astype(jnp.bfloat16)
    wgu_b, wd_b = prepare_mlp_weights(w_gate, w_up, w_down, ti=256, dtype=jnp.bfloat16)
    out_b = jax.block_until_ready(mlp_pallas(xb, wgu_b, wd_b, ti=256))
    assert jnp.allclose(out_b.astype(jnp.float32), ref, atol=3e-2, rtol=3e-2), "bf16 mismatch"

    print("KERNEL_OK")
</pallas_src>

<mosaic_0001>
module attributes {stable_mosaic.version = 11 : i64} {
  func.func @mlp_kernel(%arg0: i32, %arg1: i32, %arg2: memref<16x256xf32, #tpu.memory_space<vmem>>, %arg3: memref<256x512xf32, #tpu.memory_space<vmem>>, %arg4: memref<256x256xf32, #tpu.memory_space<vmem>>, %arg5: memref<16x256xf32, #tpu.memory_space<vmem>>, %arg6: memref<16x256xf32, #tpu.memory_space<vmem>>) attributes {dimension_semantics = [#tpu.dimension_semantics<parallel>, #tpu.dimension_semantics<arbitrary>], iteration_bounds = array<i64: 1, 2>, scalar_prefetch = 0 : i64, scratch_operands = 1 : i64, tpu.core_type = #tpu.core_type<tc>, window_params = [{transform_indices = @transform_0, window_bounds = array<i64: 16, 256>}, {pipeline_mode = #tpu.pipeline_mode<double_buffered>, transform_indices = @transform_1, window_bounds = array<i64: 256, 512>}, {pipeline_mode = #tpu.pipeline_mode<double_buffered>, transform_indices = @transform_2, window_bounds = array<i64: 256, 256>}, {transform_indices = @transform_3, window_bounds = array<i64: 16, 256>}]} {
    %c0_i32 = arith.constant 0 : i32
    %0 = arith.cmpi eq, %arg1, %c0_i32 : i32
    %1 = arith.extui %0 : i1 to i32
    %c0_i32_0 = arith.constant 0 : i32
    %2 = arith.cmpi ne, %1, %c0_i32_0 : i32
    scf.if %2 {
      %cst_13 = arith.constant 0.000000e+00 : f32
      %23 = vector.broadcast %cst_13 : f32 to vector<16x256xf32>
      %c0_14 = arith.constant 0 : index
      %c0_15 = arith.constant 0 : index
      %24 = vector.load %arg6[%c0_14, %c0_15] : memref<16x256xf32, #tpu.memory_space<vmem>>, vector<16x256xf32>
      tpu.vector_store %arg6[%c0_14, %c0_15], %23 {strides = array<i32>} : memref<16x256xf32, #tpu.memory_space<vmem>>, vector<16x256xf32>,
    } else {
    }
    %c0 = arith.constant 0 : index
    %c0_1 = arith.constant 0 : index
    %3 = vector.load %arg2[%c0, %c0_1] : memref<16x256xf32, #tpu.memory_space<vmem>>, vector<16x256xf32>
    %c0_2 = arith.constant 0 : index
    %c0_3 = arith.constant 0 : index
    %4 = vector.load %arg3[%c0_2, %c0_3] : memref<256x512xf32, #tpu.memory_space<vmem>>, vector<256x512xf32>
    %cst = arith.constant dense<0.000000e+00> : vector<16x512xf32>
    %5 = tpu.matmul %3, %4, %cst {dimension_numbers = #tpu.dot_dimension_numbers<[1], [0], [0], [1], [0, 0, 1, 1], [], []>} : vector<16x256xf32>, vector<256x512xf32>, vector<16x512xf32> -> vector<16x512xf32>
    %6 = vector.extract_strided_slice %5 {offsets = [0, 0], sizes = [16, 256], strides = [1, 1]} : vector<16x512xf32> to vector<16x256xf32>
    %7 = vector.extract_strided_slice %5 {offsets = [0, 256], sizes = [16, 256], strides = [1, 1]} : vector<16x512xf32> to vector<16x256xf32>
    %8 = arith.negf %6 : vector<16x256xf32>
    %9 = math.exp %8 : vector<16x256xf32>
    %cst_4 = arith.constant 1.000000e+00 : f32
    %10 = vector.broadcast %cst_4 : f32 to vector<16x256xf32>
    %11 = arith.addf %10, %9 : vector<16x256xf32>
    %12 = arith.divf %10, %11 : vector<16x256xf32>
    %13 = arith.mulf %6, %12 : vector<16x256xf32>
    %14 = arith.mulf %13, %7 : vector<16x256xf32>
    %c0_5 = arith.constant 0 : index
    %c0_6 = arith.constant 0 : index
    %15 = vector.load %arg6[%c0_5, %c0_6] : memref<16x256xf32, #tpu.memory_space<vmem>>, vector<16x256xf32>
    %c0_7 = arith.constant 0 : index
    %c0_8 = arith.constant 0 : index
    %16 = vector.load %arg4[%c0_7, %c0_8] : memref<256x256xf32, #tpu.memory_space<vmem>>, vector<256x256xf32>
    %cst_9 = arith.constant dense<0.000000e+00> : vector<16x256xf32>
    %17 = tpu.matmul %14, %16, %cst_9 {dimension_numbers = #tpu.dot_dimension_numbers<[1], [0], [0], [1], [0, 0, 1, 1], [], []>} : vector<16x256xf32>, vector<256x256xf32>, vector<16x256xf32> -> vector<16x256xf32>
    %18 = arith.addf %15, %17 : vector<16x256xf32>
    %c0_10 = arith.constant 0 : index
    %c0_11 = arith.constant 0 : index
    %19 = vector.load %arg6[%c0_10, %c0_11] : memref<16x256xf32, #tpu.memory_space<vmem>>, vector<16x256xf32>
    tpu.vector_store %arg6[%c0_10, %c0_11], %18 {strides = array<i32>} : memref<16x256xf32, #tpu.memory_space<vmem>>, vector<16x256xf32>,
    %c1_i32 = arith.constant 1 : i32
    %20 = arith.cmpi eq, %arg1, %c1_i32 : i32
    %21 = arith.extui %20 : i1 to i32
    %c0_i32_12 = arith.constant 0 : i32
    %22 = arith.cmpi ne, %21, %c0_i32_12 : i32
    scf.if %22 {
      %c0_13 = arith.constant 0 : index
      %c0_14 = arith.constant 0 : index
      %23 = vector.load %arg6[%c0_13, %c0_14] : memref<16x256xf32, #tpu.memory_space<vmem>>, vector<16x256xf32>
      %c0_15 = arith.constant 0 : index
      %c0_16 = arith.constant 0 : index
      %24 = vector.load %arg5[%c0_15, %c0_16] : memref<16x256xf32, #tpu.memory_space<vmem>>, vector<16x256xf32>
      tpu.vector_store %arg5[%c0_15, %c0_16], %23 {strides = array<i32>} : memref<16x256xf32, #tpu.memory_space<vmem>>, vector<16x256xf32>,
    } else {
    }
    return
  }
  func.func @transform_0(%arg0: i32, %arg1: i32) -> (i32, i32) {
    %c0_i32 = arith.constant 0 : i32
    %c0_i32_0 = arith.constant 0 : i32
    return %arg0, %c0_i32 : i32, i32
  }
  func.func @transform_1(%arg0: i32, %arg1: i32) -> (i32, i32) {
    %c0_i32 = arith.constant 0 : i32
    %c0_i32_0 = arith.constant 0 : i32
    return %c0_i32, %arg1 : i32, i32
  }
  func.func @transform_2(%arg0: i32, %arg1: i32) -> (i32, i32) {
    %c0_i32 = arith.constant 0 : i32
    %c0_i32_0 = arith.constant 0 : i32
    return %arg1, %c0_i32 : i32, i32
  }
  func.func @transform_3(%arg0: i32, %arg1: i32) -> (i32, i32) {
    %c0_i32 = arith.constant 0 : i32
    %c0_i32_0 = arith.constant 0 : i32
    return %arg0, %c0_i32 : i32, i32
  }
}

</mosaic_0001>

<llo_original>
// kernel: tpu_custom_call.1
$region0: #{tpu_custom_call.1}
  #allocation0 [shape = 'u32[]', space=smem, size = 0x4, offset = 0x4, fixed_abs, tag = 'smem constant byte address 0x4 - core index']
  #allocation1 [shape = 'u32[144,128]{1,0:T(1,128)}', space=vmem, size = 0x12000, scoped, tag = 'internal scratch']
  #allocation2 [shape = 'f32[16,256]{1,0:T(8,128)}', space=vmem, size = 0x4000, scoped, tag = 'scratch operand']
  %s0 = inlined_call_operand.hbm [shape: f32[16,256], index: 0, kind: input, shape index: {}]
  %s1 = inlined_call_operand.hbm [shape: f32[256,1024], index: 1, kind: input, shape index: {}]
  %s2 = inlined_call_operand.hbm [shape: f32[512,256], index: 2, kind: input, shape index: {}]
  %s3 = inlined_call_operand.hbm [shape: f32[16,256], index: 3, kind: output, shape index: {}]
  %s4 = sld [smem:[#allocation0]]
  $region65: #{tpu_custom_call.1} parent=0
    _
  %s6 = ssub.s32 1, %s4
  %s7 = scalar_select 0, %s6, %s4
  $region1: #{tpu_custom_call.1} parent=0
    #allocation3 [shape = 'u8[16384]{0}', space=vmem, size = 0x4000, scoped, tag = 'input window, operand 0, single buffered']
    #allocation4 [shape = 's32[2]{0}', space=sflag, size = 0x8, scoped, tag = 'scoped memory for tpu_custom_call.1']
    #allocation5 [shape = 's32[2]{0}', space=sflag, size = 0x8, scoped, tag = 'scoped memory for tpu_custom_call.1']
    #allocation6 [shape = 'u8[1048576]{0}', space=vmem, size = 0x100000, scoped, tag = 'input window, operand 1']
    #allocation7 [shape = 's32[2]{0}', space=sflag, size = 0x8, scoped, tag = 'scoped memory for tpu_custom_call.1']
    #allocation8 [shape = 'u8[524288]{0}', space=vmem, size = 0x80000, scoped, tag = 'input window, operand 2']
    #allocation9 [shape = 'u8[16384]{0}', space=vmem, size = 0x4000, scoped, tag = 'output window, operand 0, single buffered']
    %8 = vsyncpa [#allocation4], 0
    %9 = vsyncpa [#allocation7], 0
    %s10 = scalar_lea.sflag [#allocation7], 1
    %11 = vsyncpa %s10, 0
    %12 = vsyncpa [#allocation5], 0
    loop: start=0, step=1, limit=4
    $region2: #{tpu_custom_call.1} parent=1 // loop_pre_header
      _
    $region3: #{tpu_custom_call.1} parent=1 // loop_header
      %s14 = sphi 0, %s18
      %p15 = scmp.ge.s32.totalorder %s14, 4
      %s21 = sphi 0, %s33
      %s22 = sphi 0, %s29
      %s23 = sphi 0, %s21
      %s24 = sphi 0, %s22
      %s25 = sphi 0, %s23
      %s26 = sphi 0, %s24
      %s36 = sphi 0, %s38
      %s39 = sphi 0, %s36
      %s40 = sphi 0, %s39
      %s56 = sphi 0, %s40
      %s62 = sphi 0, %s64
      %s65 = sphi 0, %s62
      %s66 = sphi 0, %s65
      %s82 = sphi 0, %s66
      %s88 = sphi 0, %s90
      %s91 = sphi 0, %s88
      %s92 = sphi 0, %s91
      %s108 = sphi 0, %s92
      %s114 = sphi 0, %s116
      %s117 = sphi 0, %s114
      %s118 = sphi 0, %s117
      %s134 = sphi 0, %s118
    $region4: #{tpu_custom_call.1} parent=1 // loop_header_branch
      %17 = sbr.rel (%p15) target = $region8
    $region5: #{tpu_custom_call.1} parent=1 // loop_body
      %s19 = ssub.s32 %s14, 1
      %s20 = ssub.s32 %s14, 2
      %s27 = sadd.s32 1, %s22
      %p28 = scmp.ge.s32.totalorder %s27, 2
      %s29 = scalar_select %p28, 0, %s27
      %s30 = sadd.s32 1, %s21
      %s31 = scalar_select %p28, %s30, %s21
      %p32 = scmp.ge.s32.totalorder %s31, 1
      %s33 = scalar_select %p32, 0, %s31
      %s34 = ssub.s32 %s21, %s33
      %p35 = scmp.eq.s32.totalorder %s34, 0
      %s37 = sadd.s32 %s36, 1
      %s38 = scalar_select %p35, %s36, %s37
      %p41 = pneg %p35
      %p42 = scmp.eq.s32.totalorder %s14, 1
      %p43 = por %p41, %p42
      %p44 = scmp.ne.s32.totalorder %s36, %s39
      %p45 = scmp.eq.s32.totalorder %s14, 0
      %p46 = por %p44, %p45
      %p47 = scmp.ne.s32.totalorder %s36, %s39
      %p48 = scmp.eq.s32.totalorder %s19, 1
      %p49 = por %p47, %p48
      %p50 = scmp.ne.s32.totalorder %s39, %s40
      %p51 = scmp.eq.s32.totalorder %s19, 0
      %p52 = por %p50, %p51
      %p53 = scmp.ne.s32.totalorder %s39, %s40
      %p54 = scmp.eq.s32.totalorder %s20, 1
      %p55 = por %p53, %p54
      %p57 = scmp.ne.s32.totalorder %s40, %s56
      %p58 = scmp.eq.s32.totalorder %s20, 0
      %p59 = por %p57, %p58
      %s60 = ssub.s32 %s22, %s29
      %p61 = scmp.eq.s32.totalorder %s60, 0
      %s63 = sadd.s32 %s62, 1
      %s64 = scalar_select %p61, %s62, %s63
      %p67 = pneg %p61
      %p68 = scmp.eq.s32.totalorder %s14, 1
      %p69 = por %p67, %p68
      %p70 = scmp.ne.s32.totalorder %s62, %s65
      %p71 = scmp.eq.s32.totalorder %s14, 0
      %p72 = por %p70, %p71
      %p73 = scmp.ne.s32.totalorder %s62, %s65
      %p74 = scmp.eq.s32.totalorder %s19, 1
      %p75 = por %p73, %p74
      %p76 = scmp.ne.s32.totalorder %s65, %s66
      %p77 = scmp.eq.s32.totalorder %s19, 0
      %p78 = por %p76, %p77
      %p79 = scmp.ne.s32.totalorder %s65, %s66
      %p80 = scmp.eq.s32.totalorder %s20, 1
      %p81 = por %p79, %p80
      %p83 = scmp.ne.s32.totalorder %s66, %s82
      %p84 = scmp.eq.s32.totalorder %s20, 0
      %p85 = por %p83, %p84
      %s86 = ssub.s32 %s22, %s29
      %p87 = scmp.eq.s32.totalorder %s86, 0
      %s89 = sadd.s32 %s88, 1
      %s90 = scalar_select %p87, %s88, %s89
      %p93 = pneg %p87
      %p94 = scmp.eq.s32.totalorder %s14, 1
      %p95 = por %p93, %p94
      %p96 = scmp.ne.s32.totalorder %s88, %s91
      %p97 = scmp.eq.s32.totalorder %s14, 0
      %p98 = por %p96, %p97
      %p99 = scmp.ne.s32.totalorder %s88, %s91
      %p100 = scmp.eq.s32.totalorder %s19, 1
      %p101 = por %p99, %p100
      %p102 = scmp.ne.s32.totalorder %s91, %s92
      %p103 = scmp.eq.s32.totalorder %s19, 0
      %p104 = por %p102, %p103
      %p105 = scmp.ne.s32.totalorder %s91, %s92
      %p106 = scmp.eq.s32.totalorder %s20, 1
      %p107 = por %p105, %p106
      %p109 = scmp.ne.s32.totalorder %s92, %s108
      %p110 = scmp.eq.s32.totalorder %s20, 0
      %p111 = por %p109, %p110
      %s112 = ssub.s32 %s21, %s33
      %p113 = scmp.eq.s32.totalorder %s112, 0
      %s115 = sadd.s32 %s114, 1
      %s116 = scalar_select %p113, %s114, %s115
      %p119 = pneg %p113
      %p120 = scmp.eq.s32.totalorder %s14, 1
      %p121 = por %p119, %p120
      %p122 = scmp.ne.s32.totalorder %s114, %s117
      %p123 = scmp.eq.s32.totalorder %s14, 0
      %p124 = por %p122, %p123
      %p125 = scmp.ne.s32.totalorder %s114, %s117
      %p126 = scmp.eq.s32.totalorder %s19, 1
      %p127 = por %p125, %p126
      %p128 = scmp.ne.s32.totalorder %s117, %s118
      %p129 = scmp.eq.s32.totalorder %s19, 0
      %p130 = por %p128, %p129
      %p131 = scmp.ne.s32.totalorder %s117, %s118
      %p132 = scmp.eq.s32.totalorder %s20, 1
      %p133 = por %p131, %p132
      %p135 = scmp.ne.s32.totalorder %s118, %s134
      %p136 = scmp.eq.s32.totalorder %s20, 0
      %p137 = por %p135, %p136
      %p138 = scmp.le.s32.totalorder 1, %s14
      %p139 = scmp.lt.s32.totalorder %s14, 3
      %p140 = pnand %p138, %p139
      %p141 = pneg %p140
      // Predicated region
      $region9: #{tpu_custom_call.1} parent=5 // pred_check
        _
      $region10: #{tpu_custom_call.1} parent=5 // pred_check_branch
        %143 = sbr.rel (%p140) target = $region12
      $region11: #{tpu_custom_call.1} parent=5 // pred_region
        %s144 = ssub.s32 %s14, 1
        // Predicated region
        $region13: #{tpu_custom_call.1} parent=11 // pred_check
          %p145 = pneg %p52
        $region14: #{tpu_custom_call.1} parent=11 // pred_check_branch
          %147 = sbr.rel (%p145) target = $region16
        $region15: #{tpu_custom_call.1} parent=11 // pred_region
          %s148 = smul.u32 2, %s23
          %s150 = ssub.s32 512, 512
          %151 = vsyncadd [#allocation4], %s150
          %s152 = smul.addr %s148, 2
          %s153 = smul.addr %s152, 128
          %s154 = scalar_lea.hbm %s0, %s153
          %s155 = sshll.u32 [#allocation3], 4
          %s156 = int_to_ptr.vmem [resolvable:$true] %s155
          %161 = dma.hbm_to_vmem [thread:$0]  %s154, 512, %s156, [#allocation4], 256, 256, 16
        $region16: #{tpu_custom_call.1} parent=11 // pred_fallthru
          _
      $region12: #{tpu_custom_call.1} parent=5 // pred_fallthru
        _
      %p162 = scmp.lt.s32.totalorder %s14, 2
      // Predicated region
      $region17: #{tpu_custom_call.1} parent=5 // pred_check
        %p163 = pneg %p162
      $region18: #{tpu_custom_call.1} parent=5 // pred_check_branch
        %165 = sbr.rel (%p163) target = $region20
      $region19: #{tpu_custom_call.1} parent=5 // pred_region
        // Predicated region
        $region21: #{tpu_custom_call.1} parent=19 // pred_check
          %p166 = pneg %p72
        $region22: #{tpu_custom_call.1} parent=19 // pred_check_branch
          %168 = sbr.rel (%p166) target = $region24
        $region23: #{tpu_custom_call.1} parent=19 // pred_region
          %s169 = sand.u32 %s14, 1
          %s170 = scalar_lea.sflag [#allocation7], %s169
          %s171 = sand.u32 %s62, 1
          %s172 = smul.addr %s171, 1024
          %s173 = scalar_lea.vmem [#allocation6], %s172
          %s174 = smul.u32 4, %s22
          %s176 = ssub.s32 16384, 16384
          %177 = vsyncadd %s170, %s176
          %s178 = smul.addr %s174, 128
          %s179 = scalar_lea.hbm %s1, %s178
          %s180 = sshll.u32 %s173, 4
          %s181 = int_to_ptr.vmem [resolvable:$true] %s180
          %186 = dma.hbm_to_vmem [thread:$0]  %s179, 16384, %s181, %s170, 1024, 512, 32
        $region24: #{tpu_custom_call.1} parent=19 // pred_fallthru
          _
        // Predicated region
        $region25: #{tpu_custom_call.1} parent=19 // pred_check
          %p187 = pneg %p98
        $region26: #{tpu_custom_call.1} parent=19 // pred_check_branch
          %189 = sbr.rel (%p187) target = $region28
        $region27: #{tpu_custom_call.1} parent=19 // pred_region
          %s190 = sand.u32 %s14, 1
          %s191 = scalar_lea.sflag [#allocation7], %s190
          %s192 = sand.u32 %s88, 1
          %s193 = smul.addr %s192, 512
          %s194 = scalar_lea.vmem [#allocation8], %s193
          %s195 = smul.u32 32, %s22
          %s197 = ssub.s32 8192, 8192
          %198 = vsyncadd %s191, %s197
          %s199 = smul.addr %s195, 2
          %s200 = smul.addr %s199, 128
          %s201 = scalar_lea.hbm %s2, %s200
          %s202 = sshll.u32 %s194, 4
          %s203 = int_to_ptr.vmem [resolvable:$true] %s202
          %208 = dma.hbm_to_vmem [thread:$0]  %s201, 8192, %s203, %s191, 256, 256, 16
        $region28: #{tpu_custom_call.1} parent=19 // pred_fallthru
          _
      $region20: #{tpu_custom_call.1} parent=5 // pred_fallthru
        _
      %p209 = scmp.le.s32.totalorder 1, %s14
      %p210 = scmp.lt.s32.totalorder %s14, 3
      %p211 = pnand %p209, %p210
      %p212 = pneg %p211
      // Predicated region
      $region29: #{tpu_custom_call.1} parent=5 // pred_check
        _
      $region30: #{tpu_custom_call.1} parent=5 // pred_check_branch
        %214 = sbr.rel (%p211) target = $region32
      $region31: #{tpu_custom_call.1} parent=5 // pred_region
        %s215 = ssub.s32 %s14, 1
        // Predicated region
        $region33: #{tpu_custom_call.1} parent=31 // pred_check
          %p216 = pneg %p52
        $region34: #{tpu_custom_call.1} parent=31 // pred_check_branch
          %218 = sbr.rel (%p216) target = $region36
        $region35: #{tpu_custom_call.1} parent=31 // pred_region
          %219 = dma.done [#allocation4], 512
        $region36: #{tpu_custom_call.1} parent=31 // pred_fallthru
          _
        %s220 = sand.u32 %s19, 1
        %s221 = scalar_lea.sflag [#allocation7], %s220
        %s222 = sand.u32 %s65, 1
        %s223 = smul.addr %s222, 1024
        %s224 = scalar_lea.vmem [#allocation6], %s223
        // Predicated region
        $region37: #{tpu_custom_call.1} parent=31 // pred_check
          %p225 = pneg %p78
        $region38: #{tpu_custom_call.1} parent=31 // pred_check_branch
          %227 = sbr.rel (%p225) target = $region40
        $region39: #{tpu_custom_call.1} parent=31 // pred_region
          %228 = dma.done %s221, 16384
        $region40: #{tpu_custom_call.1} parent=31 // pred_fallthru
          _
        %s229 = sand.u32 %s19, 1
        %s230 = scalar_lea.sflag [#allocation7], %s229
        %s231 = sand.u32 %s91, 1
        %s232 = smul.addr %s231, 512
        %s233 = scalar_lea.vmem [#allocation8], %s232
        // Predicated region
        $region41: #{tpu_custom_call.1} parent=31 // pred_check
          %p234 = pneg %p104
        $region42: #{tpu_custom_call.1} parent=31 // pred_check_branch
          %236 = sbr.rel (%p234) target = $region44
        $region43: #{tpu_custom_call.1} parent=31 // pred_region
          %237 = dma.done %s230, 8192
        $region44: #{tpu_custom_call.1} parent=31 // pred_fallthru
          _
        %p238 = pneg %p52
        %p239 = pneg %p49
        %s240 = sand.u32 %s19, 1
        %s241 = scalar_lea.sflag [#allocation7], %s240
        %s242 = sand.u32 %s65, 1
        %s243 = smul.addr %s242, 1024
        %s244 = scalar_lea.vmem [#allocation6], %s243
        %p245 = pneg %p78
        %p246 = pneg %p75
        %s247 = sand.u32 %s19, 1
        %s248 = scalar_lea.sflag [#allocation7], %s247
        %s249 = sand.u32 %s91, 1
        %s250 = smul.addr %s249, 512
        %s251 = scalar_lea.vmem [#allocation8], %s250
        %p252 = pneg %p104
        %p253 = pneg %p101
        %p254 = pneg %p130
        %p255 = pneg %p127
        %s256 = smul.u32 2, %s23
        %s257 = smul.u32 4, %s24
        %s258 = smul.u32 32, %s24
        %s259 = smul.u32 2, %s23
        %p260 = scmp.eq.s32.totalorder %s24, 0
        // Predicated region
        $region45: #{tpu_custom_call.1} parent=31 // pred_check
          %p261 = pneg %p260
        $region46: #{tpu_custom_call.1} parent=31 // pred_check_branch
          %263 = sbr.rel (%p261) target = $region48
        $region47: #{tpu_custom_call.1} parent=31 // pred_region
          %264 = vst [vmem:[#allocation2] sm:$0xff] 0.0
          %265 = vst [vmem:[#allocation2 + $0x8] sm:$0xff] 0.0
          %266 = vst [vmem:[#allocation2 + $0x10] sm:$0xff] 0.0
          %267 = vst [vmem:[#allocation2 + $0x18] sm:$0xff] 0.0
        $region48: #{tpu_custom_call.1} parent=31 // pred_fallthru
          _
        %v268 = vld [vmem:[#allocation3] sm:$0xff]
        %v269 = vld [vmem:[#allocation3 + $0x8] sm:$0xff]
        %v270 = vld [vmem:[#allocation3 + $0x10] sm:$0xff]
        %v271 = vld [vmem:[#allocation3 + $0x18] sm:$0xff]
        %v272 = vld [vmem:[%s224] sm:$0xff]
        %v273 = vld [vmem:[%s224 + $0x8] sm:$0xff]
        %v274 = vld [vmem:[%s224 + $0x10] sm:$0xff]
        %v275 = vld [vmem:[%s224 + $0x18] sm:$0xff]
        %v276 = vld [vmem:[%s224 + $0x20] sm:$0xff]
        %v277 = vld [vmem:[%s224 + $0x28] sm:$0xff]
        %v278 = vld [vmem:[%s224 + $0x30] sm:$0xff]
        %v279 = vld [vmem:[%s224 + $0x38] sm:$0xff]
        %v280 = vld [vmem:[%s224 + $0x40] sm:$0xff]
        %v281 = vld [vmem:[%s224 + $0x48] sm:$0xff]
        %v282 = vld [vmem:[%s224 + $0x50] sm:$0xff]
        %v283 = vld [vmem:[%s224 + $0x58] sm:$0xff]
        %v284 = vld [vmem:[%s224 + $0x60] sm:$0xff]
        %v285 = vld [vmem:[%s224 + $0x68] sm:$0xff]
        %v286 = vld [vmem:[%s224 + $0x70] sm:$0xff]
        %v287 = vld [vmem:[%s224 + $0x78] sm:$0xff]
        %v288 = vld [vmem:[%s224 + $0x80] sm:$0xff]
        %v289 = vld [vmem:[%s224 + $0x88] sm:$0xff]
        %v290 = vld [vmem:[%s224 + $0x90] sm:$0xff]
        %v291 = vld [vmem:[%s224 + $0x98] sm:$0xff]
        %v292 = vld [vmem:[%s224 + $0xa0] sm:$0xff]
        %v293 = vld [vmem:[%s224 + $0xa8] sm:$0xff]
        %v294 = vld [vmem:[%s224 + $0xb0] sm:$0xff]
        %v295 = vld [vmem:[%s224 + $0xb8] sm:$0xff]
        %v296 = vld [vmem:[%s224 + $0xc0] sm:$0xff]
        %v297 = vld [vmem:[%s224 + $0xc8] sm:$0xff]
        %v298 = vld [vmem:[%s224 + $0xd0] sm:$0xff]
        %v299 = vld [vmem:[%s224 + $0xd8] sm:$0xff]
        %v300 = vld [vmem:[%s224 + $0xe0] sm:$0xff]
        %v301 = vld [vmem:[%s224 + $0xe8] sm:$0xff]
        %v302 = vld [vmem:[%s224 + $0xf0] sm:$0xff]
        %v303 = vld [vmem:[%s224 + $0xf8] sm:$0xff]
        %v304 = vld [vmem:[%s224 + $0x100] sm:$0xff]
        %v305 = vld [vmem:[%s224 + $0x108] sm:$0xff]
        %v306 = vld [vmem:[%s224 + $0x110] sm:$0xff]
        %v307 = vld [vmem:[%s224 + $0x118] sm:$0xff]
        %v308 = vld [vmem:[%s224 + $0x120] sm:$0xff]
        %v309 = vld [vmem:[%s224 + $0x128] sm:$0xff]
        %v310 = vld [vmem:[%s224 + $0x130] sm:$0xff]
        %v311 = vld [vmem:[%s224 + $0x138] sm:$0xff]
        %v312 = vld [vmem:[%s224 + $0x140] sm:$0xff]
        %v313 = vld [vmem:[%s224 + $0x148] sm:$0xff]
        %v314 = vld [vmem:[%s224 + $0x150] sm:$0xff]
        %v315 = vld [vmem:[%s224 + $0x158] sm:$0xff]
        %v316 = vld [vmem:[%s224 + $0x160] sm:$0xff]
        %v317 = vld [vmem:[%s224 + $0x168] sm:$0xff]
        %v318 = vld [vmem:[%s224 + $0x170] sm:$0xff]
        %v319 = vld [vmem:[%s224 + $0x178] sm:$0xff]
        %v320 = vld [vmem:[%s224 + $0x180] sm:$0xff]
        %v321 = vld [vmem:[%s224 + $0x188] sm:$0xff]
        %v322 = vld [vmem:[%s224 + $0x190] sm:$0xff]
        %v323 = vld [vmem:[%s224 + $0x198] sm:$0xff]
        %v324 = vld [vmem:[%s224 + $0x1a0] sm:$0xff]
        %v325 = vld [vmem:[%s224 + $0x1a8] sm:$0xff]
        %v326 = vld [vmem:[%s224 + $0x1b0] sm:$0xff]
        %v327 = vld [vmem:[%s224 + $0x1b8] sm:$0xff]
        %v328 = vld [vmem:[%s224 + $0x1c0] sm:$0xff]
        %v329 = vld [vmem:[%s224 + $0x1c8] sm:$0xff]
        %v330 = vld [vmem:[%s224 + $0x1d0] sm:$0xff]
        %v331 = vld [vmem:[%s224 + $0x1d8] sm:$0xff]
        %v332 = vld [vmem:[%s224 + $0x1e0] sm:$0xff]
        %v333 = vld [vmem:[%s224 + $0x1e8] sm:$0xff]
        %v334 = vld [vmem:[%s224 + $0x1f0] sm:$0xff]
        %v335 = vld [vmem:[%s224 + $0x1f8] sm:$0xff]
        %v336 = vld [vmem:[%s224 + $0x200] sm:$0xff]
        %v337 = vld [vmem:[%s224 + $0x208] sm:$0xff]
        %v338 = vld [vmem:[%s224 + $0x210] sm:$0xff]
        %v339 = vld [vmem:[%s224 + $0x218] sm:$0xff]
        %v340 = vld [vmem:[%s224 + $0x220] sm:$0xff]
        %v341 = vld [vmem:[%s224 + $0x228] sm:$0xff]
        %v342 = vld [vmem:[%s224 + $0x230] sm:$0xff]
        %v343 = vld [vmem:[%s224 + $0x238] sm:$0xff]
        %v344 = vld [vmem:[%s224 + $0x240] sm:$0xff]
        %v345 = vld [vmem:[%s224 + $0x248] sm:$0xff]
        %v346 = vld [vmem:[%s224 + $0x250] sm:$0xff]
        %v347 = vld [vmem:[%s224 + $0x258] sm:$0xff]
        %v348 = vld [vmem:[%s224 + $0x260] sm:$0xff]
        %v349 = vld [vmem:[%s224 + $0x268] sm:$0xff]
        %v350 = vld [vmem:[%s224 + $0x270] sm:$0xff]
        %v351 = vld [vmem:[%s224 + $0x278] sm:$0xff]
        %v352 = vld [vmem:[%s224 + $0x280] sm:$0xff]
        %v353 = vld [vmem:[%s224 + $0x288] sm:$0xff]
        %v354 = vld [vmem:[%s224 + $0x290] sm:$0xff]
        %v355 = vld [vmem:[%s224 + $0x298] sm:$0xff]
        %v356 = vld [vmem:[%s224 + $0x2a0] sm:$0xff]
        %v357 = vld [vmem:[%s224 + $0x2a8] sm:$0xff]
        %v358 = vld [vmem:[%s224 + $0x2b0] sm:$0xff]
        %v359 = vld [vmem:[%s224 + $0x2b8] sm:$0xff]
        %v360 = vld [vmem:[%s224 + $0x2c0] sm:$0xff]
        %v361 = vld [vmem:[%s224 + $0x2c8] sm:$0xff]
        %v362 = vld [vmem:[%s224 + $0x2d0] sm:$0xff]
        %v363 = vld [vmem:[%s224 + $0x2d8] sm:$0xff]
        %v364 = vld [vmem:[%s224 + $0x2e0] sm:$0xff]
        %v365 = vld [vmem:[%s224 + $0x2e8] sm:$0xff]
        %v366 = vld [vmem:[%s224 + $0x2f0] sm:$0xff]
        %v367 = vld [vmem:[%s224 + $0x2f8] sm:$0xff]
        %v368 = vld [vmem:[%s224 + $0x300] sm:$0xff]
        %v369 = vld [vmem:[%s224 + $0x308] sm:$0xff]
        %v370 = vld [vmem:[%s224 + $0x310] sm:$0xff]
        %v371 = vld [vmem:[%s224 + $0x318] sm:$0xff]
        %v372 = vld [vmem:[%s224 + $0x320] sm:$0xff]
        %v373 = vld [vmem:[%s224 + $0x328] sm:$0xff]
        %v374 = vld [vmem:[%s224 + $0x330] sm:$0xff]
        %v375 = vld [vmem:[%s224 + $0x338] sm:$0xff]
        %v376 = vld [vmem:[%s224 + $0x340] sm:$0xff]
        %v377 = vld [vmem:[%s224 + $0x348] sm:$0xff]
        %v378 = vld [vmem:[%s224 + $0x350] sm:$0xff]
        %v379 = vld [vmem:[%s224 + $0x358] sm:$0xff]
        %v380 = vld [vmem:[%s224 + $0x360] sm:$0xff]
        %v381 = vld [vmem:[%s224 + $0x368] sm:$0xff]
        %v382 = vld [vmem:[%s224 + $0x370] sm:$0xff]
        %v383 = vld [vmem:[%s224 + $0x378] sm:$0xff]
        %v384 = vld [vmem:[%s224 + $0x380] sm:$0xff]
        %v385 = vld [vmem:[%s224 + $0x388] sm:$0xff]
        %v386 = vld [vmem:[%s224 + $0x390] sm:$0xff]
        %v387 = vld [vmem:[%s224 + $0x398] sm:$0xff]
        %v388 = vld [vmem:[%s224 + $0x3a0] sm:$0xff]
        %v389 = vld [vmem:[%s224 + $0x3a8] sm:$0xff]
        %v390 = vld [vmem:[%s224 + $0x3b0] sm:$0xff]
        %v391 = vld [vmem:[%s224 + $0x3b8] sm:$0xff]
        %v392 = vld [vmem:[%s224 + $0x3c0] sm:$0xff]
        %v393 = vld [vmem:[%s224 + $0x3c8] sm:$0xff]
        %v394 = vld [vmem:[%s224 + $0x3d0] sm:$0xff]
        %v395 = vld [vmem:[%s224 + $0x3d8] sm:$0xff]
        %v396 = vld [vmem:[%s224 + $0x3e0] sm:$0xff]
        %v397 = vld [vmem:[%s224 + $0x3e8] sm:$0xff]
        %v398 = vld [vmem:[%s224 + $0x3f0] sm:$0xff]
        %v399 = vld [vmem:[%s224 + $0x3f8] sm:$0xff]
        %400 = vmatprep.subr.mxu0 %v273
        %401 = vmatpush1.msra.mxu0 %v272
        %402 = vmatprep.subr.mxu0 %v277
        %403 = vmatpush1.msra.mxu0 %v276
        %404 = vmatprep.subr.mxu0 %v281
        %405 = vmatpush1.msra.mxu0 %v280
        %406 = vmatprep.subr.mxu0 %v285
        %407 = vmatpush1.msra.mxu0 %v284
        %408 = vmatprep.subr.mxu0 %v289
        %409 = vmatpush1.msra.mxu0 %v288
        %410 = vmatprep.subr.mxu0 %v293
        %411 = vmatpush1.msra.mxu0 %v292
        %412 = vmatprep.subr.mxu0 %v297
        %413 = vmatpush1.msra.mxu0 %v296
        %414 = vmatprep.subr.mxu0 %v301
        %415 = vmatpush1.msra.mxu0 %v300
        %416 = vmatprep.subr.mxu0 %v305
        %417 = vmatpush1.msra.mxu0 %v304
        %418 = vmatprep.subr.mxu0 %v309
        %419 = vmatpush1.msra.mxu0 %v308
        %420 = vmatprep.subr.mxu0 %v313
        %421 = vmatpush1.msra.mxu0 %v312
        %422 = vmatprep.subr.mxu0 %v317
        %423 = vmatpush1.msra.mxu0 %v316
        %424 = vmatprep.subr.mxu0 %v321
        %425 = vmatpush1.msra.mxu0 %v320
        %426 = vmatprep.subr.mxu0 %v325
        %427 = vmatpush1.msra.mxu0 %v324
        %428 = vmatprep.subr.mxu0 %v329
        %429 = vmatpush1.msra.mxu0 %v328
        %430 = vmatprep.subr.mxu0 %v333
        %431 = vmatpush1.msra.mxu0 %v332
        %432 = vmatprep.subr.mxu0 %v337
        %433 = vmatpush1.msra.mxu0 %v336
        %434 = vmatprep.subr.mxu0 %v341
        %435 = vmatpush1.msra.mxu0 %v340
        %436 = vmatprep.subr.mxu0 %v345
        %437 = vmatpush1.msra.mxu0 %v344
        %438 = vmatprep.subr.mxu0 %v349
        %439 = vmatpush1.msra.mxu0 %v348
        %440 = vmatprep.subr.mxu0 %v353
        %441 = vmatpush1.msra.mxu0 %v352
        %442 = vmatprep.subr.mxu0 %v357
        %443 = vmatpush1.msra.mxu0 %v356
        %444 = vmatprep.subr.mxu0 %v361
        %445 = vmatpush1.msra.mxu0 %v360
        %446 = vmatprep.subr.mxu0 %v365
        %447 = vmatpush1.msra.mxu0 %v364
        %448 = vmatprep.subr.mxu0 %v369
        %449 = vmatpush1.msra.mxu0 %v368
        %450 = vmatprep.subr.mxu0 %v373
        %451 = vmatpush1.msra.mxu0 %v372
        %452 = vmatprep.subr.mxu0 %v377
        %453 = vmatpush1.msra.mxu0 %v376
        %454 = vmatprep.subr.mxu0 %v381
        %455 = vmatpush1.msra.mxu0 %v380
        %456 = vmatprep.subr.mxu0 %v385
        %457 = vmatpush1.msra.mxu0 %v384
        %458 = vmatprep.subr.mxu0 %v389
        %459 = vmatpush1.msra.mxu0 %v388
        %460 = vmatprep.subr.mxu0 %v393
        %461 = vmatpush1.msra.mxu0 %v392
        %462 = vmatprep.subr.mxu0 %v397
        %463 = vmatpush1.msra.mxu0 %v396
        %464 = vmatprep.mubr.f32.mxu0 %v269
        %465 = vmatmul.mubr.f32.gmra.mrb[0].mxu0 %v268
        %v466 = vpop.f32.mrb[0].mxu0
        %v467 = vadd.f32 0.0, %v466
        %v468 = vpop.f32.mrb[0].mxu0
        %v469 = vadd.f32 0.0, %v468
        %470 = vmatprep.mubr.f32.mxu0 %v271
        %471 = vmatmul.mubr.f32.gmra.mrb[0].mxu0 %v270
        %v472 = vpop.f32.mrb[0].mxu0
        %v473 = vadd.f32 0.0, %v472
        %v474 = vpop.f32.mrb[0].mxu0
        %v475 = vadd.f32 0.0, %v474
        %476 = vdwg.mxu0
        %477 = vmatprep.subr.mxu0 %v275
        %478 = vmatpush1.msra.mxu0 %v274
        %479 = vmatprep.subr.mxu0 %v279
        %480 = vmatpush1.msra.mxu0 %v278
        %481 = vmatprep.subr.mxu0 %v283
        %482 = vmatpush1.msra.mxu0 %v282
        %483 = vmatprep.subr.mxu0 %v287
        %484 = vmatpush1.msra.mxu0 %v286
        %485 = vmatprep.subr.mxu0 %v291
        %486 = vmatpush1.msra.mxu0 %v290
        %487 = vmatprep.subr.mxu0 %v295
        %488 = vmatpush1.msra.mxu0 %v294
        %489 = vmatprep.subr.mxu0 %v299
        %490 = vmatpush1.msra.mxu0 %v298
        %491 = vmatprep.subr.mxu0 %v303
        %492 = vmatpush1.msra.mxu0 %v302
        %493 = vmatprep.subr.mxu0 %v307
        %494 = vmatpush1.msra.mxu0 %v306
        %495 = vmatprep.subr.mxu0 %v311
        %496 = vmatpush1.msra.mxu0 %v310
        %497 = vmatprep.subr.mxu0 %v315
        %498 = vmatpush1.msra.mxu0 %v314
        %499 = vmatprep.subr.mxu0 %v319
        %500 = vmatpush1.msra.mxu0 %v318
        %501 = vmatprep.subr.mxu0 %v323
        %502 = vmatpush1.msra.mxu0 %v322
        %503 = vmatprep.subr.mxu0 %v327
        %504 = vmatpush1.msra.mxu0 %v326
        %505 = vmatprep.subr.mxu0 %v331
        %506 = vmatpush1.msra.mxu0 %v330
        %507 = vmatprep.subr.mxu0 %v335
        %508 = vmatpush1.msra.mxu0 %v334
        %509 = vmatprep.subr.mxu0 %v339
        %510 = vmatpush1.msra.mxu0 %v338
        %511 = vmatprep.subr.mxu0 %v343
        %512 = vmatpush1.msra.mxu0 %v342
        %513 = vmatprep.subr.mxu0 %v347
        %514 = vmatpush1.msra.mxu0 %v346
        %515 = vmatprep.subr.mxu0 %v351
        %516 = vmatpush1.msra.mxu0 %v350
        %517 = vmatprep.subr.mxu0 %v355
        %518 = vmatpush1.msra.mxu0 %v354
        %519 = vmatprep.subr.mxu0 %v359
        %520 = vmatpush1.msra.mxu0 %v358
        %521 = vmatprep.subr.mxu0 %v363
        %522 = vmatpush1.msra.mxu0 %v362
        %523 = vmatprep.subr.mxu0 %v367
        %524 = vmatpush1.msra.mxu0 %v366
        %525 = vmatprep.subr.mxu0 %v371
        %526 = vmatpush1.msra.mxu0 %v370
        %527 = vmatprep.subr.mxu0 %v375
        %528 = vmatpush1.msra.mxu0 %v374
        %529 = vmatprep.subr.mxu0 %v379
        %530 = vmatpush1.msra.mxu0 %v378
        %531 = vmatprep.subr.mxu0 %v383
        %532 = vmatpush1.msra.mxu0 %v382
        %533 = vmatprep.subr.mxu0 %v387
        %534 = vmatpush1.msra.mxu0 %v386
        %535 = vmatprep.subr.mxu0 %v391
        %536 = vmatpush1.msra.mxu0 %v390
        %537 = vmatprep.subr.mxu0 %v395
        %538 = vmatpush1.msra.mxu0 %v394
        %539 = vmatprep.subr.mxu0 %v399
        %540 = vmatpush1.msra.mxu0 %v398
        %541 = vmatprep.mubr.f32.mxu0 %v269
        %542 = vmatmul.mubr.f32.gmra.mrb[0].mxu0 %v268
        %v543 = vpop.f32.mrb[0].mxu0
        %v544 = vadd.f32 0.0, %v543
        %v545 = vpop.f32.mrb[0].mxu0
        %v546 = vadd.f32 0.0, %v545
        %547 = vmatprep.mubr.f32.mxu0 %v271
        %548 = vmatmul.mubr.f32.gmra.mrb[0].mxu0 %v270
        %v549 = vpop.f32.mrb[0].mxu0
        %v550 = vadd.f32 0.0, %v549
        %v551 = vpop.f32.mrb[0].mxu0
        %v552 = vadd.f32 0.0, %v551
        %553 = vdwg.mxu0
        %v554 = vxor.u32 %v467, 2147483648
        %v555 = vxor.u32 %v469, 2147483648
        %v556 = vxor.u32 %v473, 2147483648
        %v557 = vxor.u32 %v475, 2147483648
        %v558 = vmul.f32 %v554, 1.442695
        %v559 = vpow.pop %v558
        %v560 = vmul.f32 %v555, 1.442695
        %v561 = vpow.pop %v560
        %v562 = vmul.f32 %v556, 1.442695
        %v563 = vpow.pop %v562
        %v564 = vmul.f32 %v557, 1.442695
        %v565 = vpow.pop %v564
        %v566 = vadd.f32 %v559, 1.0
        %v567 = vadd.f32 %v561, 1.0
        %v568 = vadd.f32 %v563, 1.0
        %v569 = vadd.f32 %v565, 1.0
        %v570 = vrcp.pop %v566
        %v571 = vmul.f32 1.0, %v570
        %v572 = vrcp.pop %v567
        %v573 = vmul.f32 1.0, %v572
        %v574 = vrcp.pop %v568
        %v575 = vmul.f32 1.0, %v574
        %v576 = vrcp.pop %v569
        %v577 = vmul.f32 1.0, %v576
        %v578 = vmul.f32 %v467, %v571
        %v579 = vmul.f32 %v469, %v573
        %v580 = vmul.f32 %v473, %v575
        %v581 = vmul.f32 %v475, %v577
        %v582 = vmul.f32 %v578, %v544
        %v583 = vmul.f32 %v579, %v546
        %v584 = vmul.f32 %v580, %v550
        %v585 = vmul.f32 %v581, %v552
        %v586 = vld [vmem:[#allocation2] sm:$0xff]
        %v587 = vld [vmem:[#allocation2 + $0x8] sm:$0xff]
        %v588 = vld [vmem:[#allocation2 + $0x10] sm:$0xff]
        %v589 = vld [vmem:[#allocation2 + $0x18] sm:$0xff]
        %v590 = vld [vmem:[%s233] sm:$0xff]
        %v591 = vld [vmem:[%s233 + $0x8] sm:$0xff]
        %v592 = vld [vmem:[%s233 + $0x10] sm:$0xff]
        %v593 = vld [vmem:[%s233 + $0x18] sm:$0xff]
        %v594 = vld [vmem:[%s233 + $0x20] sm:$0xff]
        %v595 = vld [vmem:[%s233 + $0x28] sm:$0xff]
        %v596 = vld [vmem:[%s233 + $0x30] sm:$0xff]
        %v597 = vld [vmem:[%s233 + $0x38] sm:$0xff]
        %v598 = vld [vmem:[%s233 + $0x40] sm:$0xff]
        %v599 = vld [vmem:[%s233 + $0x48] sm:$0xff]
        %v600 = vld [vmem:[%s233 + $0x50] sm:$0xff]
        %v601 = vld [vmem:[%s233 + $0x58] sm:$0xff]
        %v602 = vld [vmem:[%s233 + $0x60] sm:$0xff]
        %v603 = vld [vmem:[%s233 + $0x68] sm:$0xff]
        %v604 = vld [vmem:[%s233 + $0x70] sm:$0xff]
        %v605 = vld [vmem:[%s233 + $0x78] sm:$0xff]
        %v606 = vld [vmem:[%s233 + $0x80] sm:$0xff]
        %v607 = vld [vmem:[%s233 + $0x88] sm:$0xff]
        %v608 = vld [vmem:[%s233 + $0x90] sm:$0xff]
        %v609 = vld [vmem:[%s233 + $0x98] sm:$0xff]
        %v610 = vld [vmem:[%s233 + $0xa0] sm:$0xff]
        %v611 = vld [vmem:[%s233 + $0xa8] sm:$0xff]
        %v612 = vld [vmem:[%s233 + $0xb0] sm:$0xff]
        %v613 = vld [vmem:[%s233 + $0xb8] sm:$0xff]
        %v614 = vld [vmem:[%s233 + $0xc0] sm:$0xff]
        %v615 = vld [vmem:[%s233 + $0xc8] sm:$0xff]
        %v616 = vld [vmem:[%s233 + $0xd0] sm:$0xff]
        %v617 = vld [vmem:[%s233 + $0xd8] sm:$0xff]
        %v618 = vld [vmem:[%s233 + $0xe0] sm:$0xff]
        %v619 = vld [vmem:[%s233 + $0xe8] sm:$0xff]
        %v620 = vld [vmem:[%s233 + $0xf0] sm:$0xff]
        %v621 = vld [vmem:[%s233 + $0xf8] sm:$0xff]
        %v622 = vld [vmem:[%s233 + $0x100] sm:$0xff]
        %v623 = vld [vmem:[%s233 + $0x108] sm:$0xff]
        %v624 = vld [vmem:[%s233 + $0x110] sm:$0xff]
        %v625 = vld [vmem:[%s233 + $0x118] sm:$0xff]
        %v626 = vld [vmem:[%s233 + $0x120] sm:$0xff]
        %v627 = vld [vmem:[%s233 + $0x128] sm:$0xff]
        %v628 = vld [vmem:[%s233 + $0x130] sm:$0xff]
        %v629 = vld [vmem:[%s233 + $0x138] sm:$0xff]
        %v630 = vld [vmem:[%s233 + $0x140] sm:$0xff]
        %v631 = vld [vmem:[%s233 + $0x148] sm:$0xff]
        %v632 = vld [vmem:[%s233 + $0x150] sm:$0xff]
        %v633 = vld [vmem:[%s233 + $0x158] sm:$0xff]
        %v634 = vld [vmem:[%s233 + $0x160] sm:$0xff]
        %v635 = vld [vmem:[%s233 + $0x168] sm:$0xff]
        %v636 = vld [vmem:[%s233 + $0x170] sm:$0xff]
        %v637 = vld [vmem:[%s233 + $0x178] sm:$0xff]
        %v638 = vld [vmem:[%s233 + $0x180] sm:$0xff]
        %v639 = vld [vmem:[%s233 + $0x188] sm:$0xff]
        %v640 = vld [vmem:[%s233 + $0x190] sm:$0xff]
        %v641 = vld [vmem:[%s233 + $0x198] sm:$0xff]
        %v642 = vld [vmem:[%s233 + $0x1a0] sm:$0xff]
        %v643 = vld [vmem:[%s233 + $0x1a8] sm:$0xff]
        %v644 = vld [vmem:[%s233 + $0x1b0] sm:$0xff]
        %v645 = vld [vmem:[%s233 + $0x1b8] sm:$0xff]
        %v646 = vld [vmem:[%s233 + $0x1c0] sm:$0xff]
        %v647 = vld [vmem:[%s233 + $0x1c8] sm:$0xff]
        %v648 = vld [vmem:[%s233 + $0x1d0] sm:$0xff]
        %v649 = vld [vmem:[%s233 + $0x1d8] sm:$0xff]
        %v650 = vld [vmem:[%s233 + $0x1e0] sm:$0xff]
        %v651 = vld [vmem:[%s233 + $0x1e8] sm:$0xff]
        %v652 = vld [vmem:[%s233 + $0x1f0] sm:$0xff]
        %v653 = vld [vmem:[%s233 + $0x1f8] sm:$0xff]
        %654 = vmatprep.subr.mxu0 %v591
        %655 = vmatpush1.msra.mxu0 %v590
        %656 = vmatprep.subr.mxu0 %v593
        %657 = vmatpush1.msra.mxu0 %v592
        %658 = vmatprep.subr.mxu0 %v595
        %659 = vmatpush1.msra.mxu0 %v594
        %660 = vmatprep.subr.mxu0 %v597
        %661 = vmatpush1.msra.mxu0 %v596
        %662 = vmatprep.subr.mxu0 %v599
        %663 = vmatpush1.msra.mxu0 %v598
        %664 = vmatprep.subr.mxu0 %v601
        %665 = vmatpush1.msra.mxu0 %v600
        %666 = vmatprep.subr.mxu0 %v603
        %667 = vmatpush1.msra.mxu0 %v602
        %668 = vmatprep.subr.mxu0 %v605
        %669 = vmatpush1.msra.mxu0 %v604
        %670 = vmatprep.subr.mxu0 %v607
        %671 = vmatpush1.msra.mxu0 %v606
        %672 = vmatprep.subr.mxu0 %v609
        %673 = vmatpush1.msra.mxu0 %v608
        %674 = vmatprep.subr.mxu0 %v611
        %675 = vmatpush1.msra.mxu0 %v610
        %676 = vmatprep.subr.mxu0 %v613
        %677 = vmatpush1.msra.mxu0 %v612
        %678 = vmatprep.subr.mxu0 %v615
        %679 = vmatpush1.msra.mxu0 %v614
        %680 = vmatprep.subr.mxu0 %v617
        %681 = vmatpush1.msra.mxu0 %v616
        %682 = vmatprep.subr.mxu0 %v619
        %683 = vmatpush1.msra.mxu0 %v618
        %684 = vmatprep.subr.mxu0 %v621
        %685 = vmatpush1.msra.mxu0 %v620
        %686 = vmatprep.subr.mxu0 %v623
        %687 = vmatpush1.msra.mxu0 %v622
        %688 = vmatprep.subr.mxu0 %v625
        %689 = vmatpush1.msra.mxu0 %v624
        %690 = vmatprep.subr.mxu0 %v627
        %691 = vmatpush1.msra.mxu0 %v626
        %692 = vmatprep.subr.mxu0 %v629
        %693 = vmatpush1.msra.mxu0 %v628
        %694 = vmatprep.subr.mxu0 %v631
        %695 = vmatpush1.msra.mxu0 %v630
        %696 = vmatprep.subr.mxu0 %v633
        %697 = vmatpush1.msra.mxu0 %v632
        %698 = vmatprep.subr.mxu0 %v635
        %699 = vmatpush1.msra.mxu0 %v634
        %700 = vmatprep.subr.mxu0 %v637
        %701 = vmatpush1.msra.mxu0 %v636
        %702 = vmatprep.subr.mxu0 %v639
        %703 = vmatpush1.msra.mxu0 %v638
        %704 = vmatprep.subr.mxu0 %v641
        %705 = vmatpush1.msra.mxu0 %v640
        %706 = vmatprep.subr.mxu0 %v643
        %707 = vmatpush1.msra.mxu0 %v642
        %708 = vmatprep.subr.mxu0 %v645
        %709 = vmatpush1.msra.mxu0 %v644
        %710 = vmatprep.subr.mxu0 %v647
        %711 = vmatpush1.msra.mxu0 %v646
        %712 = vmatprep.subr.mxu0 %v649
        %713 = vmatpush1.msra.mxu0 %v648
        %714 = vmatprep.subr.mxu0 %v651
        %715 = vmatpush1.msra.mxu0 %v650
        %716 = vmatprep.subr.mxu0 %v653
        %717 = vmatpush1.msra.mxu0 %v652
        %718 = vmatprep.mubr.f32.mxu0 %v583
        %719 = vmatmul.mubr.f32.gmra.mrb[0].mxu0 %v582
        %v720 = vpop.f32.mrb[0].mxu0
        %v721 = vadd.f32 0.0, %v720
        %v722 = vpop.f32.mrb[0].mxu0
        %v723 = vadd.f32 0.0, %v722
        %724 = vmatprep.mubr.f32.mxu0 %v585
        %725 = vmatmul.mubr.f32.gmra.mrb[0].mxu0 %v584
        %v726 = vpop.f32.mrb[0].mxu0
        %v727 = vadd.f32 0.0, %v726
        %v728 = vpop.f32.mrb[0].mxu0
        %v729 = vadd.f32 0.0, %v728
        %730 = vdwg.mxu0
        %v731 = vadd.f32 %v586, %v721
        %v732 = vadd.f32 %v587, %v723
        %v733 = vadd.f32 %v588, %v727
        %v734 = vadd.f32 %v589, %v729
        %735 = vst [vmem:[#allocation2] sm:$0xff] %v731
        %736 = vst [vmem:[#allocation2 + $0x8] sm:$0xff] %v732
        %737 = vst [vmem:[#allocation2 + $0x10] sm:$0xff] %v733
        %738 = vst [vmem:[#allocation2 + $0x18] sm:$0xff] %v734
        %p739 = scmp.eq.s32.totalorder %s24, 1
        // Predicated region
        $region49: #{tpu_custom_call.1} parent=31 // pred_check
          %p740 = pneg %p739
        $region50: #{tpu_custom_call.1} parent=31 // pred_check_branch
          %742 = sbr.rel (%p740) target = $region52
        $region51: #{tpu_custom_call.1} parent=31 // pred_region
          %v743 = vld [vmem:[#allocation2] sm:$0xff]
          %v744 = vld [vmem:[#allocation2 + $0x8] sm:$0xff]
          %v745 = vld [vmem:[#allocation2 + $0x10] sm:$0xff]
          %v746 = vld [vmem:[#allocation2 + $0x18] sm:$0xff]
          %747 = vst [vmem:[#allocation9] sm:$0xff] %v743
          %748 = vst [vmem:[#allocation9 + $0x8] sm:$0xff] %v744
          %749 = vst [vmem:[#allocation9 + $0x10] sm:$0xff] %v745
          %750 = vst [vmem:[#allocation9 + $0x18] sm:$0xff] %v746
        $region52: #{tpu_custom_call.1} parent=31 // pred_fallthru
          _
        // Predicated region
        $region53: #{tpu_custom_call.1} parent=31 // pred_check
          %p751 = pneg %p127
        $region54: #{tpu_custom_call.1} parent=31 // pred_check_branch
          %753 = sbr.rel (%p751) target = $region56
        $region55: #{tpu_custom_call.1} parent=31 // pred_region
          %s754 = smul.u32 2, %s23
          %s756 = ssub.s32 512, 512
          %757 = vsyncadd [#allocation5], %s756
          %s758 = smul.addr %s754, 2
          %s759 = smul.addr %s758, 128
          %s760 = scalar_lea.hbm %s3, %s759
          %s761 = sshll.u32 [#allocation9], 4
          %s762 = int_to_ptr.vmem [resolvable:$true] %s761
          %767 = dma.vmem_to_hbm [thread:$0]  %s762, 512, %s760, [#allocation5], 256, 256, 16
        $region56: #{tpu_custom_call.1} parent=31 // pred_fallthru
          _
        // Predicated region
        $region57: #{tpu_custom_call.1} parent=31 // pred_check
          %p768 = pneg %p127
        $region58: #{tpu_custom_call.1} parent=31 // pred_check_branch
          %770 = sbr.rel (%p768) target = $region60
        $region59: #{tpu_custom_call.1} parent=31 // pred_region
          %771 = dma.done [#allocation5], 512
        $region60: #{tpu_custom_call.1} parent=31 // pred_fallthru
          _
      $region32: #{tpu_custom_call.1} parent=5 // pred_fallthru
        _
      %p772 = scmp.le.s32.totalorder 2, %s14
      // Predicated region
      $region61: #{tpu_custom_call.1} parent=5 // pred_check
        %p773 = pneg %p772
      $region62: #{tpu_custom_call.1} parent=5 // pred_check_branch
        %775 = sbr.rel (%p773) target = $region64
      $region63: #{tpu_custom_call.1} parent=5 // pred_region
        %s776 = ssub.s32 %s14, 2
      $region64: #{tpu_custom_call.1} parent=5 // pred_fallthru
        _
    $region6: #{tpu_custom_call.1} parent=1 // loop_footer
      %s18 = sadd.s32 1, %s14
    $region7: #{tpu_custom_call.1} parent=1 // loop_footer_branch
      %13 = sbr.rel target = $region3
    $region8: #{tpu_custom_call.1} parent=1 // loop_exit
      _
    %777 = vsyncpa [#allocation4], 1
    %s778 = scalar_lea.sflag [#allocation4], 1
    %779 = vsyncpa %s778, 1
    %780 = vsyncpa [#allocation7], 1
    %s781 = scalar_lea.sflag [#allocation7], 1
    %782 = vsyncpa %s781, 1
    %783 = vsyncpa [#allocation5], 1
    %s784 = scalar_lea.sflag [#allocation5], 1
    %785 = vsyncpa %s784, 1

</llo_original>
